<compile_context>
chip_gen: v6e
topology: v6e:2x2x1
jax: 0.10.0
libtpu: 0.0.40
codegen_flags: <defaults>
</compile_context>

<pallas_src>
import jax
import jax.numpy as jnp
from jax import lax
from jax.experimental import pallas as pl
from jax.experimental.pallas import tpu as pltpu

_LANES = 128
_MAX_TILE_ROWS = 2048   # (2048, 128) f32 tile = 1 MiB; x2 pipeline buffers = 2 MiB.
_CORE_SPLITS = 2        # leading "parallel" axis -> both TensorCores on v7x.


def _make_log_sum_kernel(*, one_minus, neutral, rows, tile_rows,
                         tiles_per_split, needs_mask):
    """Kernel accumulating sum(log(x)) (or sum(log(1-x))) into an (8,128) slab."""

    def kernel(x_ref, out_ref):
        c = pl.program_id(0)          # core-split index      (parallel)
        i = pl.program_id(1)          # row-tile index        (reduction)

        @pl.when(i == 0)
        def _init():
            out_ref[...] = jnp.zeros_like(out_ref)

        x = x_ref[...]                                   # (tile_rows, 128) f32
        if needs_mask:
            # Mask rows past the real data (edge-tile overhang and fully
            # out-of-range tiles of a core split) with a log-neutral value so
            # they contribute exactly 0 to the sum.
            gid = c * tiles_per_split + i                # logical (unclamped) tile id
            row_ids = gid * tile_rows + lax.broadcasted_iota(
                jnp.int32, (tile_rows, _LANES), 0)
            x = jnp.where(row_ids < rows, x, jnp.float32(neutral))

        vals = jnp.log(1.0 - x) if one_minus else jnp.log(x)
        # Sublane-folded partial sum: (T,128)->(T//8,8,128), reduce the leading
        # axis = pure elementwise VPU adds into the resident output block.
        out_ref[...] += jnp.sum(
            vals.reshape(tile_rows // 8, 8, _LANES), axis=0
        ).reshape(1, 8, _LANES)

    return kernel


def _log_sum(x, *, one_minus):
    """sum(log(x)) or sum(log(1-x)) over all elements of x, as an f32 scalar."""
    neutral = 0.0 if one_minus else 1.0
    flat = x.reshape(-1).astype(jnp.float32)
    n = flat.shape[0]

    if n < 8 * _LANES:
        # Tiny input (below one (8,128) tile): not worth a kernel launch.
        vals = jnp.log(1.0 - flat) if one_minus else jnp.log(flat)
        return jnp.sum(vals)

    if n % _LANES == 0:
        x2d = flat.reshape(-1, _LANES)      # zero-copy bitcast reshape
    else:
        # Rare ragged case: pad only to the next 128 multiple with a
        # log-neutral value (padded elements contribute 0 to the sum).
        pad = (-n) % _LANES
        x2d = jnp.pad(flat, (0, pad), constant_values=neutral).reshape(-1, _LANES)

    rows = x2d.shape[0]
    tile_rows = min(_MAX_TILE_ROWS, (rows // 8) * 8)      # multiple of 8, <= rows
    total_tiles = pl.cdiv(rows, tile_rows)
    tiles_per_split = pl.cdiv(total_tiles, _CORE_SPLITS)
    needs_mask = _CORE_SPLITS * tiles_per_split * tile_rows != rows

    kernel = _make_log_sum_kernel(
        one_minus=one_minus, neutral=neutral, rows=rows, tile_rows=tile_rows,
        tiles_per_split=tiles_per_split, needs_mask=needs_mask)

    partials = pl.pallas_call(
        kernel,
        out_shape=jax.ShapeDtypeStruct((_CORE_SPLITS, 8, _LANES), jnp.float32),
        grid=(_CORE_SPLITS, tiles_per_split),
        in_specs=[pl.BlockSpec(
            (tile_rows, _LANES),
            # Clamp so the DMA'd block always starts in bounds; the in-kernel
            # row mask zeroes out any duplicated / over-range contribution.
            lambda c, i: (jnp.minimum(c * tiles_per_split + i, total_tiles - 1), 0),
        )],
        out_specs=pl.BlockSpec((1, 8, _LANES), lambda c, i: (c, 0, 0)),
        compiler_params=pltpu.CompilerParams(
            dimension_semantics=("parallel", "arbitrary")),
    )(x2d)
    # Single cheap cross-lane reduction on a tiny (2, 8, 128) array, in JAX.
    return jnp.sum(partials)


@jax.jit
def jsd_loss2(f_0_estim, f_1_estim):
    """Pallas implementation of JSDLoss2: log(f1).mean() + log(1 - f0).mean()."""
    s1 = _log_sum(f_1_estim, one_minus=False)
    s0 = _log_sum(f_0_estim, one_minus=True)
    return s1 / f_1_estim.size + s0 / f_0_estim.size


if __name__ == "__main__":
    key = jax.random.PRNGKey(0)
    k0, k1 = jax.random.split(key)
    # Discriminator-style outputs in (0, 1); small shapes: batch=2, ch=4, 16x16.
    shape = (2, 4, 16, 16)
    f0 = jax.random.uniform(k0, shape, dtype=jnp.float32, minval=0.05, maxval=0.95)
    f1 = jax.random.uniform(k1, shape, dtype=jnp.float32, minval=0.05, maxval=0.95)

    out = jax.block_until_ready(jsd_loss2(f0, f1))

    # Pure-JAX reference (same semantics as the PyTorch module).
    ref = jnp.log(f1).mean() + jnp.log(1.0 - f0).mean()
    assert jnp.allclose(out, ref, rtol=1e-5, atol=1e-5), (out, ref)

    print("KERNEL_OK")
</pallas_src>

<mosaic_0001>
module attributes {stable_mosaic.version = 11 : i64} {
  func.func @kernel(%arg0: i32, %arg1: i32, %arg2: memref<16x128xf32, #tpu.memory_space<vmem>>, %arg3: memref<1x8x128xf32, #tpu.memory_space<vmem>>) attributes {dimension_semantics = [#tpu.dimension_semantics<parallel>, #tpu.dimension_semantics<arbitrary>], iteration_bounds = array<i64: 2, 1>, scalar_prefetch = 0 : i64, scratch_operands = 0 : i64, tpu.core_type = #tpu.core_type<tc>, window_params = [{transform_indices = @transform_0, window_bounds = array<i64: 16, 128>}, {transform_indices = @transform_1, window_bounds = array<i64: 1, 8, 128>}]} {
    %c0_i32 = arith.constant 0 : i32
    %0 = arith.cmpi eq, %arg1, %c0_i32 : i32
    %1 = arith.extui %0 : i1 to i32
    %c0_i32_0 = arith.constant 0 : i32
    %2 = arith.cmpi ne, %1, %c0_i32_0 : i32
    scf.if %2 {
      %cst_11 = arith.constant 0.000000e+00 : f32
      %23 = vector.broadcast %cst_11 : f32 to vector<1x8x128xf32>
      %c0_12 = arith.constant 0 : index
      %c0_13 = arith.constant 0 : index
      %c0_14 = arith.constant 0 : index
      %24 = vector.load %arg3[%c0_12, %c0_13, %c0_14] : memref<1x8x128xf32, #tpu.memory_space<vmem>>, vector<1x8x128xf32>
      tpu.vector_store %arg3[%c0_12, %c0_13, %c0_14], %23 {strides = array<i32>} : memref<1x8x128xf32, #tpu.memory_space<vmem>>, vector<1x8x128xf32>,
    } else {
    }
    %c0 = arith.constant 0 : index
    %c0_1 = arith.constant 0 : index
    %3 = vector.load %arg2[%c0, %c0_1] : memref<16x128xf32, #tpu.memory_space<vmem>>, vector<16x128xf32>
    %c1_i32 = arith.constant 1 : i32
    %4 = arith.muli %arg0, %c1_i32 : i32
    %5 = arith.addi %4, %arg1 : i32
    %c16_i32 = arith.constant 16 : i32
    %6 = arith.muli %5, %c16_i32 : i32
    %7 = tpu.iota {dimensions = array<i32: 0>} : vector<16x128xi32>
    %8 = vector.broadcast %6 : i32 to vector<16x128xi32>
    %9 = arith.addi %8, %7 : vector<16x128xi32>
    %c16_i32_2 = arith.constant 16 : i32
    %10 = vector.broadcast %c16_i32_2 : i32 to vector<16x128xi32>
    %11 = arith.cmpi slt, %9, %10 : vector<16x128xi32>
    %cst = arith.constant 0.000000e+00 : f32
    %12 = vector.broadcast %cst : f32 to vector<16x128xf32>
    %13 = arith.select %11, %3, %12 : vector<16x128xi1>, vector<16x128xf32>
    %cst_3 = arith.constant 1.000000e+00 : f32
    %14 = vector.broadcast %cst_3 : f32 to vector<16x128xf32>
    %15 = arith.subf %14, %13 : vector<16x128xf32>
    %16 = math.log %15 : vector<16x128xf32>
    %c0_4 = arith.constant 0 : index
    %c0_5 = arith.constant 0 : index
    %c0_6 = arith.constant 0 : index
    %17 = vector.load %arg3[%c0_4, %c0_5, %c0_6] : memref<1x8x128xf32, #tpu.memory_space<vmem>>, vector<1x8x128xf32>
    %18 = vector.shape_cast %16 : vector<16x128xf32> to vector<2x8x128xf32>
    %cst_7 = arith.constant dense<0.000000e+00> : vector<8x128xf32>
    %19 = vector.multi_reduction <add>, %18, %cst_7 [0] : vector<2x8x128xf32> to vector<8x128xf32>
    %20 = vector.shape_cast %19 : vector<8x128xf32> to vector<1x8x128xf32>
    %21 = arith.addf %17, %20 : vector<1x8x128xf32>
    %c0_8 = arith.constant 0 : index
    %c0_9 = arith.constant 0 : index
    %c0_10 = arith.constant 0 : index
    %22 = vector.load %arg3[%c0_8, %c0_9, %c0_10] : memref<1x8x128xf32, #tpu.memory_space<vmem>>, vector<1x8x128xf32>
    tpu.vector_store %arg3[%c0_8, %c0_9, %c0_10], %21 {strides = array<i32>} : memref<1x8x128xf32, #tpu.memory_space<vmem>>, vector<1x8x128xf32>,
    return
  }
  func.func @transform_0(%arg0: i32, %arg1: i32) -> (i32, i32) {
    %c1_i32 = arith.constant 1 : i32
    %0 = arith.muli %arg0, %c1_i32 : i32
    %1 = arith.addi %0, %arg1 : i32
    %c0_i32 = arith.constant 0 : i32
    %2 = arith.minsi %1, %c0_i32 : i32
    %c0_i32_0 = arith.constant 0 : i32
    %c0_i32_1 = arith.constant 0 : i32
    return %2, %c0_i32_0 : i32, i32
  }
  func.func @transform_1(%arg0: i32, %arg1: i32) -> (i32, i32, i32) {
    %c0_i32 = arith.constant 0 : i32
    %c0_i32_0 = arith.constant 0 : i32
    %c0_i32_1 = arith.constant 0 : i32
    return %arg0, %c0_i32, %c0_i32_0 : i32, i32, i32
  }
}

module attributes {stable_mosaic.version = 11 : i64} {
  func.func @kernel(%arg0: i32, %arg1: i32, %arg2: memref<16x128xf32, #tpu.memory_space<vmem>>, %arg3: memref<1x8x128xf32, #tpu.memory_space<vmem>>) attributes {dimension_semantics = [#tpu.dimension_semantics<parallel>, #tpu.dimension_semantics<arbitrary>], iteration_bounds = array<i64: 2, 1>, scalar_prefetch = 0 : i64, scratch_operands = 0 : i64, tpu.core_type = #tpu.core_type<tc>, window_params = [{transform_indices = @transform_0, window_bounds = array<i64: 16, 128>}, {transform_indices = @transform_1, window_bounds = array<i64: 1, 8, 128>}]} {
    %c0_i32 = arith.constant 0 : i32
    %0 = arith.cmpi eq, %arg1, %c0_i32 : i32
    %1 = arith.extui %0 : i1 to i32
    %c0_i32_0 = arith.constant 0 : i32
    %2 = arith.cmpi ne, %1, %c0_i32_0 : i32
    scf.if %2 {
      %cst_10 = arith.constant 0.000000e+00 : f32
      %21 = vector.broadcast %cst_10 : f32 to vector<1x8x128xf32>
      %c0_11 = arith.constant 0 : index
      %c0_12 = arith.constant 0 : index
      %c0_13 = arith.constant 0 : index
      %22 = vector.load %arg3[%c0_11, %c0_12, %c0_13] : memref<1x8x128xf32, #tpu.memory_space<vmem>>, vector<1x8x128xf32>
      tpu.vector_store %arg3[%c0_11, %c0_12, %c0_13], %21 {strides = array<i32>} : memref<1x8x128xf32, #tpu.memory_space<vmem>>, vector<1x8x128xf32>,
    } else {
    }
    %c0 = arith.constant 0 : index
    %c0_1 = arith.constant 0 : index
    %3 = vector.load %arg2[%c0, %c0_1] : memref<16x128xf32, #tpu.memory_space<vmem>>, vector<16x128xf32>
    %c1_i32 = arith.constant 1 : i32
    %4 = arith.muli %arg0, %c1_i32 : i32
    %5 = arith.addi %4, %arg1 : i32
    %c16_i32 = arith.constant 16 : i32
    %6 = arith.muli %5, %c16_i32 : i32
    %7 = tpu.iota {dimensions = array<i32: 0>} : vector<16x128xi32>
    %8 = vector.broadcast %6 : i32 to vector<16x128xi32>
    %9 = arith.addi %8, %7 : vector<16x128xi32>
    %c16_i32_2 = arith.constant 16 : i32
    %10 = vector.broadcast %c16_i32_2 : i32 to vector<16x128xi32>
    %11 = arith.cmpi slt, %9, %10 : vector<16x128xi32>
    %cst = arith.constant 1.000000e+00 : f32
    %12 = vector.broadcast %cst : f32 to vector<16x128xf32>
    %13 = arith.select %11, %3, %12 : vector<16x128xi1>, vector<16x128xf32>
    %14 = math.log %13 : vector<16x128xf32>
    %c0_3 = arith.constant 0 : index
    %c0_4 = arith.constant 0 : index
    %c0_5 = arith.constant 0 : index
    %15 = vector.load %arg3[%c0_3, %c0_4, %c0_5] : memref<1x8x128xf32, #tpu.memory_space<vmem>>, vector<1x8x128xf32>
    %16 = vector.shape_cast %14 : vector<16x128xf32> to vector<2x8x128xf32>
    %cst_6 = arith.constant dense<0.000000e+00> : vector<8x128xf32>
    %17 = vector.multi_reduction <add>, %16, %cst_6 [0] : vector<2x8x128xf32> to vector<8x128xf32>
    %18 = vector.shape_cast %17 : vector<8x128xf32> to vector<1x8x128xf32>
    %19 = arith.addf %15, %18 : vector<1x8x128xf32>
    %c0_7 = arith.constant 0 : index
    %c0_8 = arith.constant 0 : index
    %c0_9 = arith.constant 0 : index
    %20 = vector.load %arg3[%c0_7, %c0_8, %c0_9] : memref<1x8x128xf32, #tpu.memory_space<vmem>>, vector<1x8x128xf32>
    tpu.vector_store %arg3[%c0_7, %c0_8, %c0_9], %19 {strides = array<i32>} : memref<1x8x128xf32, #tpu.memory_space<vmem>>, vector<1x8x128xf32>,
    return
  }
  func.func @transform_0(%arg0: i32, %arg1: i32) -> (i32, i32) {
    %c1_i32 = arith.constant 1 : i32
    %0 = arith.muli %arg0, %c1_i32 : i32
    %1 = arith.addi %0, %arg1 : i32
    %c0_i32 = arith.constant 0 : i32
    %2 = arith.minsi %1, %c0_i32 : i32
    %c0_i32_0 = arith.constant 0 : i32
    %c0_i32_1 = arith.constant 0 : i32
    return %2, %c0_i32_0 : i32, i32
  }
  func.func @transform_1(%arg0: i32, %arg1: i32) -> (i32, i32, i32) {
    %c0_i32 = arith.constant 0 : i32
    %c0_i32_0 = arith.constant 0 : i32
    %c0_i32_1 = arith.constant 0 : i32
    return %arg0, %c0_i32, %c0_i32_0 : i32, i32, i32
  }
}

</mosaic_0001>

<llo_original>
// kernel: jsd_loss2.2
$region0: #{jsd_loss2.2}
  #allocation0 [shape = 'u32[]', space=smem, size = 0x4, offset = 0x4, fixed_abs, tag = 'smem constant byte address 0x4 - core index']
  #allocation1 [shape = 'u32[144,128]{1,0:T(1,128)}', space=vmem, size = 0x12000, scoped, tag = 'internal scratch']
  %s0 = inlined_call_operand.vmem [shape: f32[16,128], index: 0, kind: input, shape index: {}]
  %s1 = inlined_call_operand.vmem [shape: f32[2,8,128], index: 1, kind: output, shape index: {}]
  %s2 = sld [smem:[#allocation0]]
  $region41: #{jsd_loss2.2} parent=0
    _
  %s4 = ssub.s32 1, %s2
  %s5 = scalar_select 0, %s4, %s2
  loop: start=0, step=1, limit=4
  $region2: #{jsd_loss2.2} parent=0 // loop_pre_header
    _
  $region3: #{jsd_loss2.2} parent=0 // loop_header
    %s7 = sphi 0, %s11
    %p8 = scmp.ge.s32.totalorder %s7, 4
    %s14 = sphi 0, %s26
    %s15 = sphi 0, %s22
    %s16 = sphi 0, %s14
    %s17 = sphi 0, %s15
    %s18 = sphi 0, %s16
    %s19 = sphi 0, %s17
    %s35 = sphi 0, %s37
    %s38 = sphi 0, %s35
    %s39 = sphi 0, %s38
    %s55 = sphi 0, %s39
    %s61 = sphi 0, %s63
    %s64 = sphi 0, %s61
    %s65 = sphi 0, %s64
    %s81 = sphi 0, %s65
  $region4: #{jsd_loss2.2} parent=0 // loop_header_branch
    %10 = sbr.rel (%p8) target = $region8
  $region5: #{jsd_loss2.2} parent=0 // loop_body
    %s12 = ssub.s32 %s7, 1
    %s13 = ssub.s32 %s7, 2
    %s20 = sadd.s32 1, %s15
    %p21 = scmp.ge.s32.totalorder %s20, 1
    %s22 = scalar_select %p21, 0, %s20
    %s23 = sadd.s32 1, %s14
    %s24 = scalar_select %p21, %s23, %s14
    %p25 = scmp.ge.s32.totalorder %s24, 2
    %s26 = scalar_select %p25, 0, %s24
    %s27 = sadd.s32 %s14, %s15
    %p28 = scmp.lt.s32.totalorder %s27, 0
    %s29 = scalar_select %p28, %s27, 0
    %s30 = sadd.s32 %s26, %s22
    %p31 = scmp.lt.s32.totalorder %s30, 0
    %s32 = scalar_select %p31, %s30, 0
    %s33 = ssub.s32 %s29, %s32
    %p34 = scmp.eq.s32.totalorder %s33, 0
    %s36 = sadd.s32 %s35, 1
    %s37 = scalar_select %p34, %s35, %s36
    %p40 = pneg %p34
    %p41 = scmp.eq.s32.totalorder %s7, 1
    %p42 = por %p40, %p41
    %p43 = scmp.ne.s32.totalorder %s35, %s38
    %p44 = scmp.eq.s32.totalorder %s7, 0
    %p45 = por %p43, %p44
    %p46 = scmp.ne.s32.totalorder %s35, %s38
    %p47 = scmp.eq.s32.totalorder %s12, 1
    %p48 = por %p46, %p47
    %p49 = scmp.ne.s32.totalorder %s38, %s39
    %p50 = scmp.eq.s32.totalorder %s12, 0
    %p51 = por %p49, %p50
    %p52 = scmp.ne.s32.totalorder %s38, %s39
    %p53 = scmp.eq.s32.totalorder %s13, 1
    %p54 = por %p52, %p53
    %p56 = scmp.ne.s32.totalorder %s39, %s55
    %p57 = scmp.eq.s32.totalorder %s13, 0
    %p58 = por %p56, %p57
    %s59 = ssub.s32 %s14, %s26
    %p60 = scmp.eq.s32.totalorder %s59, 0
    %s62 = sadd.s32 %s61, 1
    %s63 = scalar_select %p60, %s61, %s62
    %p66 = pneg %p60
    %p67 = scmp.eq.s32.totalorder %s7, 1
    %p68 = por %p66, %p67
    %p69 = scmp.ne.s32.totalorder %s61, %s64
    %p70 = scmp.eq.s32.totalorder %s7, 0
    %p71 = por %p69, %p70
    %p72 = scmp.ne.s32.totalorder %s61, %s64
    %p73 = scmp.eq.s32.totalorder %s12, 1
    %p74 = por %p72, %p73
    %p75 = scmp.ne.s32.totalorder %s64, %s65
    %p76 = scmp.eq.s32.totalorder %s12, 0
    %p77 = por %p75, %p76
    %p78 = scmp.ne.s32.totalorder %s64, %s65
    %p79 = scmp.eq.s32.totalorder %s13, 1
    %p80 = por %p78, %p79
    %p82 = scmp.ne.s32.totalorder %s65, %s81
    %p83 = scmp.eq.s32.totalorder %s13, 0
    %p84 = por %p82, %p83
    %p85 = scmp.le.s32.totalorder 1, %s7
    %p86 = scmp.lt.s32.totalorder %s7, 3
    %p87 = pnand %p85, %p86
    %p88 = pneg %p87
    // Predicated region
    $region9: #{jsd_loss2.2} parent=5 // pred_check
      _
    $region10: #{jsd_loss2.2} parent=5 // pred_check_branch
      %90 = sbr.rel (%p87) target = $region12
    $region11: #{jsd_loss2.2} parent=5 // pred_region
      %s91 = ssub.s32 %s7, 1
    $region12: #{jsd_loss2.2} parent=5 // pred_fallthru
      _
    %p92 = scmp.lt.s32.totalorder %s7, 2
    // Predicated region
    $region13: #{jsd_loss2.2} parent=5 // pred_check
      %p93 = pneg %p92
    $region14: #{jsd_loss2.2} parent=5 // pred_check_branch
      %95 = sbr.rel (%p93) target = $region16
    $region15: #{jsd_loss2.2} parent=5 // pred_region
      // Predicated region
      $region17: #{jsd_loss2.2} parent=15 // pred_check
        %p96 = pneg %p45
      $region18: #{jsd_loss2.2} parent=15 // pred_check_branch
        %98 = sbr.rel (%p96) target = $region20
      $region19: #{jsd_loss2.2} parent=15 // pred_region
        %s99 = sadd.s32 %s14, %s15
        %p100 = scmp.lt.s32.totalorder %s99, 0
        %s101 = scalar_select %p100, %s99, 0
        %s102 = smul.u32 2, %s101
        %p103 = scmp.lt.s32.totalorder %s102, 1
        %s104 = scalar_select %p103, %s102, 1
        %s105 = smul.addr %s104, 8
        %s106 = scalar_lea.vmem %s0, %s105
        %s107 = sadd.s32 %s14, %s15
        %p108 = scmp.lt.s32.totalorder %s107, 0
        %s109 = scalar_select %p108, %s107, 0
        %s110 = smul.u32 2, %s109
      $region20: #{jsd_loss2.2} parent=15 // pred_fallthru
        _
    $region16: #{jsd_loss2.2} parent=5 // pred_fallthru
      _
    %p111 = scmp.le.s32.totalorder 1, %s7
    %p112 = scmp.lt.s32.totalorder %s7, 3
    %p113 = pnand %p111, %p112
    %p114 = pneg %p113
    // Predicated region
    $region21: #{jsd_loss2.2} parent=5 // pred_check
      _
    $region22: #{jsd_loss2.2} parent=5 // pred_check_branch
      %116 = sbr.rel (%p113) target = $region24
    $region23: #{jsd_loss2.2} parent=5 // pred_region
      %s117 = ssub.s32 %s7, 1
      %s118 = sadd.s32 %s16, %s17
      %p119 = scmp.lt.s32.totalorder %s118, 0
      %s120 = scalar_select %p119, %s118, 0
      %s121 = smul.u32 2, %s120
      %p122 = scmp.lt.s32.totalorder %s121, 1
      %s123 = scalar_select %p122, %s121, 1
      %s124 = smul.addr %s123, 8
      %s125 = scalar_lea.vmem %s0, %s124
      %p126 = pneg %p51
      %p127 = pneg %p48
      %p128 = pneg %p77
      %p129 = pneg %p74
      %p130 = scmp.lt.s32.totalorder %s16, 1
      %s131 = scalar_select %p130, %s16, 1
      %s132 = smul.addr %s131, 8
      %s133 = scalar_lea.vmem %s1, %s132
      %s134 = sadd.s32 %s16, %s17
      %p135 = scmp.lt.s32.totalorder %s134, 0
      %s136 = scalar_select %p135, %s134, 0
      %s137 = smul.u32 2, %s136
      %p138 = scmp.lt.s32.totalorder %s137, 1
      %s139 = scalar_select %p138, %s137, 1
      %s140 = smul.addr %s139, 8
      %s141 = scalar_lea.vmem %s0, %s140
      %s142 = sadd.s32 %s16, %s17
      %p143 = scmp.lt.s32.totalorder %s142, 0
      %s144 = scalar_select %p143, %s142, 0
      %s145 = smul.u32 2, %s144
      %p146 = scmp.lt.s32.totalorder %s16, 1
      %s147 = scalar_select %p146, %s16, 1
      %s148 = smul.addr %s147, 8
      %s149 = scalar_lea.vmem %s1, %s148
      %p150 = scmp.eq.s32.totalorder %s17, 0
      // Predicated region
      $region25: #{jsd_loss2.2} parent=23 // pred_check
        %p151 = pneg %p150
      $region26: #{jsd_loss2.2} parent=23 // pred_check_branch
        %153 = sbr.rel (%p151) target = $region28
      $region27: #{jsd_loss2.2} parent=23 // pred_region
        %154 = vst [vmem:[%s149] sm:$0xff] 0.0
      $region28: #{jsd_loss2.2} parent=23 // pred_fallthru
        _
      %v155 = vld [vmem:[%s141] sm:$0xff]
      %v156 = vld [vmem:[%s141 + $0x8] sm:$0xff]
      %s157 = sadd.s32 %s16, %s17
      %s158 = smul.u32 %s157, 16
      %v159 = vlaneseq
      %v160 = vshrl.u32 %v159, 7
      %v161 = vadd.s32 %v160, 8
      %v162 = vstv %s158
      %v163 = vadd.s32 %v162, %v160
      %v164 = vadd.s32 %v162, %v161
      %vm165 = vcmp.lt.s32.totalorder %v163, 16
      %vm166 = vcmp.lt.s32.totalorder %v164, 16
      %v167 = vsel %vm165, %v155, 1.0
      %v168 = vsel %vm166, %v156, 1.0
      %v169 = vlog2.pop %v167
      %v170 = vmul.f32 %v169, 0.6931472
      %v171 = vlog2.pop %v168
      %v172 = vmul.f32 %v171, 0.6931472
      %v173 = vld [vmem:[%s149] sm:$0xff]
      %v174 = vadd.f32 %v170, %v172
      %v175 = vadd.f32 %v173, %v174
      %176 = vst [vmem:[%s149] sm:$0xff] %v175
      %p177 = scmp.lt.s32.totalorder %s16, 1
      %s178 = scalar_select %p177, %s16, 1
      %s179 = smul.addr %s178, 8
      %s180 = scalar_lea.vmem %s1, %s179
      // Predicated region
      $region29: #{jsd_loss2.2} parent=23 // pred_check
        %p181 = pneg %p74
      $region30: #{jsd_loss2.2} parent=23 // pred_check_branch
        %183 = sbr.rel (%p181) target = $region32
      $region31: #{jsd_loss2.2} parent=23 // pred_region
        _
      $region32: #{jsd_loss2.2} parent=23 // pred_fallthru
        _
    $region24: #{jsd_loss2.2} parent=5 // pred_fallthru
      _
    %p184 = scmp.le.s32.totalorder 2, %s7
    // Predicated region
    $region33: #{jsd_loss2.2} parent=5 // pred_check
      %p185 = pneg %p184
    $region34: #{jsd_loss2.2} parent=5 // pred_check_branch
      %187 = sbr.rel (%p185) target = $region36
    $region35: #{jsd_loss2.2} parent=5 // pred_region
      %s188 = ssub.s32 %s7, 2
      // Predicated region
      $region37: #{jsd_loss2.2} parent=35 // pred_check
        %p189 = pneg %p80
      $region38: #{jsd_loss2.2} parent=35 // pred_check_branch
        %191 = sbr.rel (%p189) target = $region40
      $region39: #{jsd_loss2.2} parent=35 // pred_region
        %p192 = scmp.lt.s32.totalorder %s18, 1
        %s193 = scalar_select %p192, %s18, 1
        %s194 = smul.addr %s193, 8
        %s195 = scalar_lea.vmem %s1, %s194
      $region40: #{jsd_loss2.2} parent=35 // pred_fallthru
        _
    $region36: #{jsd_loss2.2} parent=5 // pred_fallthru
      _
  $region6: #{jsd_loss2.2} parent=0 // loop_footer
    %s11 = sadd.s32 1, %s7
  $region7: #{jsd_loss2.2} parent=0 // loop_footer_branch
    %6 = sbr.rel target = $region3
  $region8: #{jsd_loss2.2} parent=0 // loop_exit
    _

// kernel: jsd_loss2.3
$region0: #{jsd_loss2.3}
  #allocation0 [shape = 'u32[]', space=smem, size = 0x4, offset = 0x4, fixed_abs, tag = 'smem constant byte address 0x4 - core index']
  #allocation1 [shape = 'u32[144,128]{1,0:T(1,128)}', space=vmem, size = 0x12000, scoped, tag = 'internal scratch']
  %s0 = inlined_call_operand.vmem [shape: f32[16,128], index: 0, kind: input, shape index: {}]
  %s1 = inlined_call_operand.vmem [shape: f32[2,8,128], index: 1, kind: output, shape index: {}]
  %s2 = sld [smem:[#allocation0]]
  $region41: #{jsd_loss2.3} parent=0
    _
  %s4 = ssub.s32 1, %s2
  %s5 = scalar_select 0, %s4, %s2
  loop: start=0, step=1, limit=4
  $region2: #{jsd_loss2.3} parent=0 // loop_pre_header
    _
  $region3: #{jsd_loss2.3} parent=0 // loop_header
    %s7 = sphi 0, %s11
    %p8 = scmp.ge.s32.totalorder %s7, 4
    %s14 = sphi 0, %s26
    %s15 = sphi 0, %s22
    %s16 = sphi 0, %s14
    %s17 = sphi 0, %s15
    %s18 = sphi 0, %s16
    %s19 = sphi 0, %s17
    %s35 = sphi 0, %s37
    %s38 = sphi 0, %s35
    %s39 = sphi 0, %s38
    %s55 = sphi 0, %s39
    %s61 = sphi 0, %s63
    %s64 = sphi 0, %s61
    %s65 = sphi 0, %s64
    %s81 = sphi 0, %s65
  $region4: #{jsd_loss2.3} parent=0 // loop_header_branch
    %10 = sbr.rel (%p8) target = $region8
  $region5: #{jsd_loss2.3} parent=0 // loop_body
    %s12 = ssub.s32 %s7, 1
    %s13 = ssub.s32 %s7, 2
    %s20 = sadd.s32 1, %s15
    %p21 = scmp.ge.s32.totalorder %s20, 1
    %s22 = scalar_select %p21, 0, %s20
    %s23 = sadd.s32 1, %s14
    %s24 = scalar_select %p21, %s23, %s14
    %p25 = scmp.ge.s32.totalorder %s24, 2
    %s26 = scalar_select %p25, 0, %s24
    %s27 = sadd.s32 %s14, %s15
    %p28 = scmp.lt.s32.totalorder %s27, 0
    %s29 = scalar_select %p28, %s27, 0
    %s30 = sadd.s32 %s26, %s22
    %p31 = scmp.lt.s32.totalorder %s30, 0
    %s32 = scalar_select %p31, %s30, 0
    %s33 = ssub.s32 %s29, %s32
    %p34 = scmp.eq.s32.totalorder %s33, 0
    %s36 = sadd.s32 %s35, 1
    %s37 = scalar_select %p34, %s35, %s36
    %p40 = pneg %p34
    %p41 = scmp.eq.s32.totalorder %s7, 1
    %p42 = por %p40, %p41
    %p43 = scmp.ne.s32.totalorder %s35, %s38
    %p44 = scmp.eq.s32.totalorder %s7, 0
    %p45 = por %p43, %p44
    %p46 = scmp.ne.s32.totalorder %s35, %s38
    %p47 = scmp.eq.s32.totalorder %s12, 1
    %p48 = por %p46, %p47
    %p49 = scmp.ne.s32.totalorder %s38, %s39
    %p50 = scmp.eq.s32.totalorder %s12, 0
    %p51 = por %p49, %p50
    %p52 = scmp.ne.s32.totalorder %s38, %s39
    %p53 = scmp.eq.s32.totalorder %s13, 1
    %p54 = por %p52, %p53
    %p56 = scmp.ne.s32.totalorder %s39, %s55
    %p57 = scmp.eq.s32.totalorder %s13, 0
    %p58 = por %p56, %p57
    %s59 = ssub.s32 %s14, %s26
    %p60 = scmp.eq.s32.totalorder %s59, 0
    %s62 = sadd.s32 %s61, 1
    %s63 = scalar_select %p60, %s61, %s62
    %p66 = pneg %p60
    %p67 = scmp.eq.s32.totalorder %s7, 1
    %p68 = por %p66, %p67
    %p69 = scmp.ne.s32.totalorder %s61, %s64
    %p70 = scmp.eq.s32.totalorder %s7, 0
    %p71 = por %p69, %p70
    %p72 = scmp.ne.s32.totalorder %s61, %s64
    %p73 = scmp.eq.s32.totalorder %s12, 1
    %p74 = por %p72, %p73
    %p75 = scmp.ne.s32.totalorder %s64, %s65
    %p76 = scmp.eq.s32.totalorder %s12, 0
    %p77 = por %p75, %p76
    %p78 = scmp.ne.s32.totalorder %s64, %s65
    %p79 = scmp.eq.s32.totalorder %s13, 1
    %p80 = por %p78, %p79
    %p82 = scmp.ne.s32.totalorder %s65, %s81
    %p83 = scmp.eq.s32.totalorder %s13, 0
    %p84 = por %p82, %p83
    %p85 = scmp.le.s32.totalorder 1, %s7
    %p86 = scmp.lt.s32.totalorder %s7, 3
    %p87 = pnand %p85, %p86
    %p88 = pneg %p87
    // Predicated region
    $region9: #{jsd_loss2.3} parent=5 // pred_check
      _
    $region10: #{jsd_loss2.3} parent=5 // pred_check_branch
      %90 = sbr.rel (%p87) target = $region12
    $region11: #{jsd_loss2.3} parent=5 // pred_region
      %s91 = ssub.s32 %s7, 1
    $region12: #{jsd_loss2.3} parent=5 // pred_fallthru
      _
    %p92 = scmp.lt.s32.totalorder %s7, 2
    // Predicated region
    $region13: #{jsd_loss2.3} parent=5 // pred_check
      %p93 = pneg %p92
    $region14: #{jsd_loss2.3} parent=5 // pred_check_branch
      %95 = sbr.rel (%p93) target = $region16
    $region15: #{jsd_loss2.3} parent=5 // pred_region
      // Predicated region
      $region17: #{jsd_loss2.3} parent=15 // pred_check
        %p96 = pneg %p45
      $region18: #{jsd_loss2.3} parent=15 // pred_check_branch
        %98 = sbr.rel (%p96) target = $region20
      $region19: #{jsd_loss2.3} parent=15 // pred_region
        %s99 = sadd.s32 %s14, %s15
        %p100 = scmp.lt.s32.totalorder %s99, 0
        %s101 = scalar_select %p100, %s99, 0
        %s102 = smul.u32 2, %s101
        %p103 = scmp.lt.s32.totalorder %s102, 1
        %s104 = scalar_select %p103, %s102, 1
        %s105 = smul.addr %s104, 8
        %s106 = scalar_lea.vmem %s0, %s105
        %s107 = sadd.s32 %s14, %s15
        %p108 = scmp.lt.s32.totalorder %s107, 0
        %s109 = scalar_select %p108, %s107, 0
        %s110 = smul.u32 2, %s109
      $region20: #{jsd_loss2.3} parent=15 // pred_fallthru
        _
    $region16: #{jsd_loss2.3} parent=5 // pred_fallthru
      _
    %p111 = scmp.le.s32.totalorder 1, %s7
    %p112 = scmp.lt.s32.totalorder %s7, 3
    %p113 = pnand %p111, %p112
    %p114 = pneg %p113
    // Predicated region
    $region21: #{jsd_loss2.3} parent=5 // pred_check
      _
    $region22: #{jsd_loss2.3} parent=5 // pred_check_branch
      %116 = sbr.rel (%p113) target = $region24
    $region23: #{jsd_loss2.3} parent=5 // pred_region
      %s117 = ssub.s32 %s7, 1
      %s118 = sadd.s32 %s16, %s17
      %p119 = scmp.lt.s32.totalorder %s118, 0
      %s120 = scalar_select %p119, %s118, 0
      %s121 = smul.u32 2, %s120
      %p122 = scmp.lt.s32.totalorder %s121, 1
      %s123 = scalar_select %p122, %s121, 1
      %s124 = smul.addr %s123, 8
      %s125 = scalar_lea.vmem %s0, %s124
      %p126 = pneg %p51
      %p127 = pneg %p48
      %p128 = pneg %p77
      %p129 = pneg %p74
      %p130 = scmp.lt.s32.totalorder %s16, 1
      %s131 = scalar_select %p130, %s16, 1
      %s132 = smul.addr %s131, 8
      %s133 = scalar_lea.vmem %s1, %s132
      %s134 = sadd.s32 %s16, %s17
      %p135 = scmp.lt.s32.totalorder %s134, 0
      %s136 = scalar_select %p135, %s134, 0
      %s137 = smul.u32 2, %s136
      %p138 = scmp.lt.s32.totalorder %s137, 1
      %s139 = scalar_select %p138, %s137, 1
      %s140 = smul.addr %s139, 8
      %s141 = scalar_lea.vmem %s0, %s140
      %s142 = sadd.s32 %s16, %s17
      %p143 = scmp.lt.s32.totalorder %s142, 0
      %s144 = scalar_select %p143, %s142, 0
      %s145 = smul.u32 2, %s144
      %p146 = scmp.lt.s32.totalorder %s16, 1
      %s147 = scalar_select %p146, %s16, 1
      %s148 = smul.addr %s147, 8
      %s149 = scalar_lea.vmem %s1, %s148
      %p150 = scmp.eq.s32.totalorder %s17, 0
      // Predicated region
      $region25: #{jsd_loss2.3} parent=23 // pred_check
        %p151 = pneg %p150
      $region26: #{jsd_loss2.3} parent=23 // pred_check_branch
        %153 = sbr.rel (%p151) target = $region28
      $region27: #{jsd_loss2.3} parent=23 // pred_region
        %154 = vst [vmem:[%s149] sm:$0xff] 0.0
      $region28: #{jsd_loss2.3} parent=23 // pred_fallthru
        _
      %v155 = vld [vmem:[%s141] sm:$0xff]
      %v156 = vld [vmem:[%s141 + $0x8] sm:$0xff]
      %s157 = sadd.s32 %s16, %s17
      %s158 = smul.u32 %s157, 16
      %v159 = vlaneseq
      %v160 = vshrl.u32 %v159, 7
      %v161 = vadd.s32 %v160, 8
      %v162 = vstv %s158
      %v163 = vadd.s32 %v162, %v160
      %v164 = vadd.s32 %v162, %v161
      %vm165 = vcmp.lt.s32.totalorder %v163, 16
      %vm166 = vcmp.lt.s32.totalorder %v164, 16
      %v167 = vsel %vm165, %v155, 0.0
      %v168 = vsel %vm166, %v156, 0.0
      %v169 = vsub.f32 1.0, %v167
      %v170 = vsub.f32 1.0, %v168
      %v171 = vlog2.pop %v169
      %v172 = vmul.f32 %v171, 0.6931472
      %v173 = vlog2.pop %v170
      %v174 = vmul.f32 %v173, 0.6931472
      %v175 = vld [vmem:[%s149] sm:$0xff]
      %v176 = vadd.f32 %v172, %v174
      %v177 = vadd.f32 %v175, %v176
      %178 = vst [vmem:[%s149] sm:$0xff] %v177
      %p179 = scmp.lt.s32.totalorder %s16, 1
      %s180 = scalar_select %p179, %s16, 1
      %s181 = smul.addr %s180, 8
      %s182 = scalar_lea.vmem %s1, %s181
      // Predicated region
      $region29: #{jsd_loss2.3} parent=23 // pred_check
        %p183 = pneg %p74
      $region30: #{jsd_loss2.3} parent=23 // pred_check_branch
        %185 = sbr.rel (%p183) target = $region32
      $region31: #{jsd_loss2.3} parent=23 // pred_region
        _
      $region32: #{jsd_loss2.3} parent=23 // pred_fallthru
        _
    $region24: #{jsd_loss2.3} parent=5 // pred_fallthru
      _
    %p186 = scmp.le.s32.totalorder 2, %s7
    // Predicated region
    $region33: #{jsd_loss2.3} parent=5 // pred_check
      %p187 = pneg %p186
    $region34: #{jsd_loss2.3} parent=5 // pred_check_branch
      %189 = sbr.rel (%p187) target = $region36
    $region35: #{jsd_loss2.3} parent=5 // pred_region
      %s190 = ssub.s32 %s7, 2
      // Predicated region
      $region37: #{jsd_loss2.3} parent=35 // pred_check
        %p191 = pneg %p80
      $region38: #{jsd_loss2.3} parent=35 // pred_check_branch
        %193 = sbr.rel (%p191) target = $region40
      $region39: #{jsd_loss2.3} parent=35 // pred_region
        %p194 = scmp.lt.s32.totalorder %s18, 1
        %s195 = scalar_select %p194, %s18, 1
        %s196 = smul.addr %s195, 8
        %s197 = scalar_lea.vmem %s1, %s196
      $region40: #{jsd_loss2.3} parent=35 // pred_fallthru
        _
    $region36: #{jsd_loss2.3} parent=5 // pred_fallthru
      _
  $region6: #{jsd_loss2.3} parent=0 // loop_footer
    %s11 = sadd.s32 1, %s7
  $region7: #{jsd_loss2.3} parent=0 // loop_footer_branch
    %6 = sbr.rel target = $region3
  $region8: #{jsd_loss2.3} parent=0 // loop_exit
    _

</llo_original>
